<compile_context>
chip_gen: v7x
topology: tpu7x:2x2x1
jax: 0.10.0
libtpu: 0.0.40
codegen_flags: <defaults>
</compile_context>

<pallas_src>
import functools

import jax
import jax.numpy as jnp
from jax.experimental import pallas as pl
from jax.experimental.pallas import tpu as pltpu


def _round_up(x, m):
    return (x + m - 1) // m * m


def _fused_rgb_kernel(sw_ref,                 # SMEM (2,) f32: softmax(comb_w) * 255
                      x_ref,                  # (TILE_B, 2E)  bf16  [parent | child]
                      w1_ref, b1_ref,         # (2E, 2H1) bf16 / (1, 2H1) f32
                      w2_ref, b2_ref,         # (2H1, 2H2) bf16 / (1, 2H2) f32
                      w3_ref, b3_ref,         # (2H2, 6)  bf16 / (1, 6)  f32
                      out_ref):               # (TILE_B, 3) f32
    """Both MLP pathways fused via block-diagonal weights + weighted combination."""
    x = x_ref[...]
    h1 = jnp.dot(x, w1_ref[...], preferred_element_type=jnp.float32) + b1_ref[...]
    h1 = jnp.maximum(h1, 0.0)                 # ReLU (Dropout = identity in eval)
    h2 = jnp.dot(h1.astype(jnp.bfloat16), w2_ref[...],
                 preferred_element_type=jnp.float32) + b2_ref[...]
    h2 = jnp.maximum(h2, 0.0)                 # ReLU (Dropout = identity in eval)
    logits = jnp.dot(h2.astype(jnp.bfloat16), w3_ref[...],
                     preferred_element_type=jnp.float32) + b3_ref[...]
    # Sigmoid via EUP exp + EUP approximate reciprocal (no VALU divide).
    rgb = pl.reciprocal(1.0 + jnp.exp(-logits), approx=True)     # (TILE_B, 6) f32
    sw0 = sw_ref[0]                           # parent weight, *255 pre-folded
    sw1 = sw_ref[1]                           # child  weight, *255 pre-folded
    out_ref[...] = rgb[:, 0:3] * sw0 + rgb[:, 3:6] * sw1


@functools.partial(jax.jit, static_argnames=("tile_b",))
def text_only_rgb_forward(parent_embed, child_embed, fused, *, tile_b=512):
    """fused: dict from prepare_fused_params(). Returns (B, 3) f32 RGB in [0, 255]."""
    B, E = parent_embed.shape
    # Concatenate + cast to bf16 once (MXU input dtype); weights are already bf16.
    x = jnp.concatenate([parent_embed, child_embed], axis=1).astype(jnp.bfloat16)

    tb = min(tile_b, _round_up(B, 8))
    Bp = _round_up(B, tb)
    if Bp != B:
        x = jnp.pad(x, ((0, Bp - B), (0, 0)))

    h1x2 = fused["w1"].shape[1]
    h2x2 = fused["w2"].shape[1]
    o2 = fused["w3"].shape[1]

    out = pl.pallas_call(
        _fused_rgb_kernel,
        out_shape=jax.ShapeDtypeStruct((Bp, o2 // 2), jnp.float32),
        grid_spec=pltpu.PrefetchScalarGridSpec(
            num_scalar_prefetch=1,            # scaled combination weights -> SMEM
            grid=(Bp // tb,),
            in_specs=[
                # batch-tiled activations (auto double-buffered)
                pl.BlockSpec((tb, 2 * E), lambda i, sw: (i, 0)),
                # weights / biases: constant index_map -> stay VMEM-resident
                pl.BlockSpec((2 * E, h1x2), lambda i, sw: (0, 0)),
                pl.BlockSpec((1, h1x2), lambda i, sw: (0, 0)),
                pl.BlockSpec((h1x2, h2x2), lambda i, sw: (0, 0)),
                pl.BlockSpec((1, h2x2), lambda i, sw: (0, 0)),
                pl.BlockSpec((h2x2, o2), lambda i, sw: (0, 0)),
                pl.BlockSpec((1, o2), lambda i, sw: (0, 0)),
            ],
            out_specs=pl.BlockSpec((tb, o2 // 2), lambda i, sw: (i, 0)),
        ),
        compiler_params=pltpu.CompilerParams(
            dimension_semantics=("parallel",)),   # shard batch grid over v7x's 2 TCs
    )(fused["scaled_w"], x,
      fused["w1"], fused["b1"], fused["w2"], fused["b2"], fused["w3"], fused["b3"])
    return out[:B]


def init_params(key, text_embed_dim, hidden_dims=(256, 128), output_dim=3):
    """Deterministic init mimicking nn.Linear default (uniform +-1/sqrt(fan_in)).

    Weights are stored transposed vs. PyTorch, i.e. (in_features, out_features).
    """
    h1, h2 = hidden_dims
    dims = [
        ("w1p", (text_embed_dim, h1)), ("b1p", (1, h1)),
        ("w2p", (h1, h2)), ("b2p", (1, h2)),
        ("w3p", (h2, output_dim)), ("b3p", (1, output_dim)),
        ("w1c", (text_embed_dim, h1)), ("b1c", (1, h1)),
        ("w2c", (h1, h2)), ("b2c", (1, h2)),
        ("w3c", (h2, output_dim)), ("b3c", (1, output_dim)),
    ]
    params = {}
    keys = jax.random.split(key, len(dims))
    for (name, shape), k in zip(dims, keys):
        fan_in = shape[0] if name.startswith("w") else shape[1]
        bound = 1.0 / jnp.sqrt(jnp.float32(fan_in))
        params[name] = jax.random.uniform(
            k, shape, dtype=jnp.float32, minval=-bound, maxval=bound)
    # nn.Parameter(torch.tensor([1.0, 2.0])) -> child pathway weighted 2x
    params["comb_w"] = jnp.array([1.0, 2.0], dtype=jnp.float32)
    return params


def prepare_fused_params(params, weight_dtype=jnp.bfloat16):
    """Build block-diagonal bf16 weights, concatenated f32 biases, scaled combo weights."""
    def blockdiag(a, b):
        top = jnp.concatenate([a, jnp.zeros((a.shape[0], b.shape[1]), a.dtype)], axis=1)
        bot = jnp.concatenate([jnp.zeros((b.shape[0], a.shape[1]), b.dtype), b], axis=1)
        return jnp.concatenate([top, bot], axis=0)

    fused = {
        "w1": blockdiag(params["w1p"], params["w1c"]).astype(weight_dtype),
        "b1": jnp.concatenate([params["b1p"], params["b1c"]], axis=1),
        "w2": blockdiag(params["w2p"], params["w2c"]).astype(weight_dtype),
        "b2": jnp.concatenate([params["b2p"], params["b2c"]], axis=1),
        "w3": blockdiag(params["w3p"], params["w3c"]).astype(weight_dtype),
        "b3": jnp.concatenate([params["b3p"], params["b3c"]], axis=1),
        # softmax over the 2 combination weights, *255 folded in -> two SMEM scalars
        "scaled_w": (jax.nn.softmax(params["comb_w"]) * 255.0).astype(jnp.float32),
    }
    return fused


def reference_forward(parent_embed, child_embed, params):
    """Pure-JAX reference of the PyTorch forward (eval mode), bf16 weights / f32 accum."""
    bf16 = jnp.bfloat16

    def pathway(x, w1, b1, w2, b2, w3, b3):
        h1 = jax.nn.relu(jnp.dot(x.astype(bf16), w1.astype(bf16),
                                 preferred_element_type=jnp.float32) + b1)
        h2 = jax.nn.relu(jnp.dot(h1.astype(bf16), w2.astype(bf16),
                                 preferred_element_type=jnp.float32) + b2)
        return jax.nn.sigmoid(jnp.dot(h2.astype(bf16), w3.astype(bf16),
                                      preferred_element_type=jnp.float32) + b3)

    p_rgb = pathway(parent_embed, params["w1p"], params["b1p"], params["w2p"],
                    params["b2p"], params["w3p"], params["b3p"])
    c_rgb = pathway(child_embed, params["w1c"], params["b1c"], params["w2c"],
                    params["b2c"], params["w3c"], params["b3c"])
    nw = jax.nn.softmax(params["comb_w"], axis=0)
    return (p_rgb * nw[0] + c_rgb * nw[1]) * 255.0


if __name__ == "__main__":
    batch = 8
    text_embed_dim = 32

    key = jax.random.PRNGKey(0)
    k_pe, k_ce, k_params = jax.random.split(key, 3)

    parent_embed = jax.random.normal(k_pe, (batch, text_embed_dim), dtype=jnp.float32)
    child_embed = jax.random.normal(k_ce, (batch, text_embed_dim), dtype=jnp.float32)
    params = init_params(k_params, text_embed_dim)
    fused = prepare_fused_params(params)

    out = text_only_rgb_forward(parent_embed, child_embed, fused)
    out = jax.block_until_ready(out)

    ref = reference_forward(parent_embed, child_embed, params)
    assert out.shape == (batch, 3), out.shape
    # bf16 weights + approx EUP reciprocal in the sigmoid -> sub-unit tolerance on 0-255.
    assert jnp.allclose(out, ref, atol=0.5, rtol=0.0), (out, ref)

    print("KERNEL_OK")
</pallas_src>

<mosaic_0001>
module attributes {stable_mosaic.version = 11 : i64} {
  func.func @_fused_rgb_kernel(%arg0: i32, %arg1: memref<2xf32, #tpu.memory_space<smem>>, %arg2: memref<8x64xbf16, #tpu.memory_space<vmem>>, %arg3: memref<64x512xbf16, #tpu.memory_space<vmem>>, %arg4: memref<1x512xf32, #tpu.memory_space<vmem>>, %arg5: memref<512x256xbf16, #tpu.memory_space<vmem>>, %arg6: memref<1x256xf32, #tpu.memory_space<vmem>>, %arg7: memref<256x6xbf16, #tpu.memory_space<vmem>>, %arg8: memref<1x6xf32, #tpu.memory_space<vmem>>, %arg9: memref<8x3xf32, #tpu.memory_space<vmem>>) attributes {dimension_semantics = [#tpu.dimension_semantics<parallel>], iteration_bounds = array<i64: 1>, scalar_prefetch = 1 : i64, scratch_operands = 0 : i64, tpu.core_type = #tpu.core_type<tc>, window_params = [{transform_indices = @transform_0, window_bounds = array<i64: 8, 64>}, {pipeline_mode = #tpu.pipeline_mode<synchronous>, transform_indices = @transform_1, window_bounds = array<i64: 64, 512>}, {pipeline_mode = #tpu.pipeline_mode<synchronous>, transform_indices = @transform_2, window_bounds = array<i64: 1, 512>}, {pipeline_mode = #tpu.pipeline_mode<synchronous>, transform_indices = @transform_3, window_bounds = array<i64: 512, 256>}, {pipeline_mode = #tpu.pipeline_mode<synchronous>, transform_indices = @transform_4, window_bounds = array<i64: 1, 256>}, {pipeline_mode = #tpu.pipeline_mode<synchronous>, transform_indices = @transform_5, window_bounds = array<i64: 256, 6>}, {pipeline_mode = #tpu.pipeline_mode<synchronous>, transform_indices = @transform_6, window_bounds = array<i64: 1, 6>}, {transform_indices = @transform_7, window_bounds = array<i64: 8, 3>}]} {
    %c0 = arith.constant 0 : index
    %c0_0 = arith.constant 0 : index
    %0 = vector.load %arg2[%c0, %c0_0] : memref<8x64xbf16, #tpu.memory_space<vmem>>, vector<8x64xbf16>
    %c0_1 = arith.constant 0 : index
    %c0_2 = arith.constant 0 : index
    %1 = vector.load %arg3[%c0_1, %c0_2] : memref<64x512xbf16, #tpu.memory_space<vmem>>, vector<64x512xbf16>
    %cst = arith.constant dense<0.000000e+00> : vector<8x512xf32>
    %2 = tpu.matmul %0, %1, %cst {dimension_numbers = #tpu.dot_dimension_numbers<[1], [0], [0], [1], [0, 0, 1, 1], [], []>} : vector<8x64xbf16>, vector<64x512xbf16>, vector<8x512xf32> -> vector<8x512xf32>
    %c0_3 = arith.constant 0 : index
    %c0_4 = arith.constant 0 : index
    %3 = vector.load %arg4[%c0_3, %c0_4] : memref<1x512xf32, #tpu.memory_space<vmem>>, vector<1x512xf32>
    %4 = vector.broadcast %3 : vector<1x512xf32> to vector<8x512xf32>
    %5 = arith.addf %2, %4 : vector<8x512xf32>
    %cst_5 = arith.constant 0.000000e+00 : f32
    %6 = vector.broadcast %cst_5 : f32 to vector<8x512xf32>
    %7 = arith.maximumf %5, %6 : vector<8x512xf32>
    %8 = arith.truncf %7 : vector<8x512xf32> to vector<8x512xbf16>
    %c0_6 = arith.constant 0 : index
    %c0_7 = arith.constant 0 : index
    %9 = vector.load %arg5[%c0_6, %c0_7] : memref<512x256xbf16, #tpu.memory_space<vmem>>, vector<512x256xbf16>
    %cst_8 = arith.constant dense<0.000000e+00> : vector<8x256xf32>
    %10 = tpu.matmul %8, %9, %cst_8 {dimension_numbers = #tpu.dot_dimension_numbers<[1], [0], [0], [1], [0, 0, 1, 1], [], []>} : vector<8x512xbf16>, vector<512x256xbf16>, vector<8x256xf32> -> vector<8x256xf32>
    %c0_9 = arith.constant 0 : index
    %c0_10 = arith.constant 0 : index
    %11 = vector.load %arg6[%c0_9, %c0_10] : memref<1x256xf32, #tpu.memory_space<vmem>>, vector<1x256xf32>
    %12 = vector.broadcast %11 : vector<1x256xf32> to vector<8x256xf32>
    %13 = arith.addf %10, %12 : vector<8x256xf32>
    %cst_11 = arith.constant 0.000000e+00 : f32
    %14 = vector.broadcast %cst_11 : f32 to vector<8x256xf32>
    %15 = arith.maximumf %13, %14 : vector<8x256xf32>
    %16 = arith.truncf %15 : vector<8x256xf32> to vector<8x256xbf16>
    %c0_12 = arith.constant 0 : index
    %c0_13 = arith.constant 0 : index
    %17 = vector.load %arg7[%c0_12, %c0_13] : memref<256x6xbf16, #tpu.memory_space<vmem>>, vector<256x6xbf16>
    %cst_14 = arith.constant dense<0.000000e+00> : vector<8x6xf32>
    %18 = tpu.matmul %16, %17, %cst_14 {dimension_numbers = #tpu.dot_dimension_numbers<[1], [0], [0], [1], [0, 0, 1, 1], [], []>} : vector<8x256xbf16>, vector<256x6xbf16>, vector<8x6xf32> -> vector<8x6xf32>
    %c0_15 = arith.constant 0 : index
    %c0_16 = arith.constant 0 : index
    %19 = vector.load %arg8[%c0_15, %c0_16] : memref<1x6xf32, #tpu.memory_space<vmem>>, vector<1x6xf32>
    %20 = vector.broadcast %19 : vector<1x6xf32> to vector<8x6xf32>
    %21 = arith.addf %18, %20 : vector<8x6xf32>
    %cst_17 = arith.constant 0.000000e+00 : f32
    %22 = vector.broadcast %cst_17 : f32 to vector<8x6xf32>
    %23 = arith.subf %22, %21 : vector<8x6xf32>
    %24 = math.exp %23 : vector<8x6xf32>
    %cst_18 = arith.constant 1.000000e+00 : f32
    %25 = vector.broadcast %cst_18 : f32 to vector<8x6xf32>
    %26 = arith.addf %25, %24 : vector<8x6xf32>
    %27 = tpu.reciprocal %26 {approx = true} : vector<8x6xf32> -> vector<8x6xf32>
    %c0_19 = arith.constant 0 : index
    %28 = memref.load %arg1[%c0_19] : memref<2xf32, #tpu.memory_space<smem>>
    %c1 = arith.constant 1 : index
    %29 = memref.load %arg1[%c1] : memref<2xf32, #tpu.memory_space<smem>>
    %30 = vector.extract_strided_slice %27 {offsets = [0, 0], sizes = [8, 3], strides = [1, 1]} : vector<8x6xf32> to vector<8x3xf32>
    %31 = vector.broadcast %28 : f32 to vector<8x3xf32>
    %32 = arith.mulf %30, %31 : vector<8x3xf32>
    %33 = vector.extract_strided_slice %27 {offsets = [0, 3], sizes = [8, 3], strides = [1, 1]} : vector<8x6xf32> to vector<8x3xf32>
    %34 = vector.broadcast %29 : f32 to vector<8x3xf32>
    %35 = arith.mulf %33, %34 : vector<8x3xf32>
    %36 = arith.addf %32, %35 : vector<8x3xf32>
    %c0_20 = arith.constant 0 : index
    %c0_21 = arith.constant 0 : index
    %37 = vector.load %arg9[%c0_20, %c0_21] : memref<8x3xf32, #tpu.memory_space<vmem>>, vector<8x3xf32>
    tpu.vector_store %arg9[%c0_20, %c0_21], %36 {strides = array<i32>} : memref<8x3xf32, #tpu.memory_space<vmem>>, vector<8x3xf32>,
    return
  }
  func.func @transform_0(%arg0: i32, %arg1: memref<2xf32, #tpu.memory_space<smem>>) -> (i32, i32) {
    %c0_i32 = arith.constant 0 : i32
    %c0_i32_0 = arith.constant 0 : i32
    return %arg0, %c0_i32 : i32, i32
  }
  func.func @transform_1(%arg0: i32, %arg1: memref<2xf32, #tpu.memory_space<smem>>) -> (i32, i32) {
    %c0_i32 = arith.constant 0 : i32
    %c0_i32_0 = arith.constant 0 : i32
    %c0_i32_1 = arith.constant 0 : i32
    return %c0_i32, %c0_i32_0 : i32, i32
  }
  func.func @transform_2(%arg0: i32, %arg1: memref<2xf32, #tpu.memory_space<smem>>) -> (i32, i32) {
    %c0_i32 = arith.constant 0 : i32
    %c0_i32_0 = arith.constant 0 : i32
    %c0_i32_1 = arith.constant 0 : i32
    return %c0_i32, %c0_i32_0 : i32, i32
  }
  func.func @transform_3(%arg0: i32, %arg1: memref<2xf32, #tpu.memory_space<smem>>) -> (i32, i32) {
    %c0_i32 = arith.constant 0 : i32
    %c0_i32_0 = arith.constant 0 : i32
    %c0_i32_1 = arith.constant 0 : i32
    return %c0_i32, %c0_i32_0 : i32, i32
  }
  func.func @transform_4(%arg0: i32, %arg1: memref<2xf32, #tpu.memory_space<smem>>) -> (i32, i32) {
    %c0_i32 = arith.constant 0 : i32
    %c0_i32_0 = arith.constant 0 : i32
    %c0_i32_1 = arith.constant 0 : i32
    return %c0_i32, %c0_i32_0 : i32, i32
  }
  func.func @transform_5(%arg0: i32, %arg1: memref<2xf32, #tpu.memory_space<smem>>) -> (i32, i32) {
    %c0_i32 = arith.constant 0 : i32
    %c0_i32_0 = arith.constant 0 : i32
    %c0_i32_1 = arith.constant 0 : i32
    return %c0_i32, %c0_i32_0 : i32, i32
  }
  func.func @transform_6(%arg0: i32, %arg1: memref<2xf32, #tpu.memory_space<smem>>) -> (i32, i32) {
    %c0_i32 = arith.constant 0 : i32
    %c0_i32_0 = arith.constant 0 : i32
    %c0_i32_1 = arith.constant 0 : i32
    return %c0_i32, %c0_i32_0 : i32, i32
  }
  func.func @transform_7(%arg0: i32, %arg1: memref<2xf32, #tpu.memory_space<smem>>) -> (i32, i32) {
    %c0_i32 = arith.constant 0 : i32
    %c0_i32_0 = arith.constant 0 : i32
    return %arg0, %c0_i32 : i32, i32
  }
}

</mosaic_0001>

<llo_original>
// kernel: text_only_rgb_forward.1
$region0: #{text_only_rgb_forward.1}
  #allocation0 [shape = 'u32[]', space=smem, size = 0x4, offset = 0x4, fixed_abs, tag = 'smem constant byte address 0x4 - core index']
  #allocation1 [shape = 'u32[144,128]{1,0:T(1,128)}', space=vmem, size = 0x12000, scoped, tag = 'internal scratch']
  #allocation2 [shape = 's32[1]{0}', space=sflag, size = 0x4, scoped, tag = 'scoped memory for text_only_rgb_forward.1']
  #allocation3 [shape = 'u8[512]{0}', space=smem, size = 0x200, scoped, tag = 'prefetched SMEM operand 0']
  %s0 = inlined_call_operand.vmem [shape: f32[2], index: 0, kind: input, shape index: {}]
  %s1 = inlined_call_operand.vmem [shape: bf16[8,64], index: 1, kind: input, shape index: {}]
  %s2 = inlined_call_operand.vmem [shape: bf16[64,512], index: 2, kind: input, shape index: {}]
  %s3 = inlined_call_operand.vmem [shape: f32[1,512], index: 3, kind: input, shape index: {}]
  %s4 = inlined_call_operand.hbm [shape: bf16[512,256], index: 4, kind: input, shape index: {}]
  %s5 = inlined_call_operand.vmem [shape: f32[1,256], index: 5, kind: input, shape index: {}]
  %s6 = inlined_call_operand.vmem [shape: bf16[256,6], index: 6, kind: input, shape index: {}]
  %s7 = inlined_call_operand.vmem [shape: f32[1,6], index: 7, kind: input, shape index: {}]
  %s8 = inlined_call_operand.vmem [shape: f32[8,3], index: 8, kind: output, shape index: {}]
  %s9 = sld [smem:[#allocation0]]
  $region42: #{text_only_rgb_forward.1} parent=0
    _
  %s11 = ssub.s32 1, %s9
  %s12 = scalar_select 0, %s11, %s9
  %s13 = sshll.u32 %s0, 4
  %s14 = int_to_ptr.vmem [resolvable:$true] %s13
  %16 = dma.vmem_to_smem %s14, 16, [#allocation3], [#allocation2]
  %17 = dma.done [#allocation2], 16
  %18 = sfence
  $region1: #{text_only_rgb_forward.1} parent=0
    #allocation4 [shape = 'u8[262144]{0}', space=vmem, size = 0x40000, scoped, tag = 'input window, operand 4, single buffered']
    #allocation5 [shape = 's32[1]{0}', space=sflag, size = 0x4, scoped, tag = 'scoped memory for text_only_rgb_forward.1']
    %19 = vsyncpa [#allocation5], 0
    // Predicated region
    $region2: #{text_only_rgb_forward.1} parent=1 // pred_check
      _
    $region3: #{text_only_rgb_forward.1} parent=1 // pred_check_branch
      %21 = sbr.rel (0) target = $region5
    $region4: #{text_only_rgb_forward.1} parent=1 // pred_region
      _
    $region5: #{text_only_rgb_forward.1} parent=1 // pred_fallthru
      _
    // Predicated region
    $region6: #{text_only_rgb_forward.1} parent=1 // pred_check
      _
    $region7: #{text_only_rgb_forward.1} parent=1 // pred_check_branch
      %23 = sbr.rel (0) target = $region9
    $region8: #{text_only_rgb_forward.1} parent=1 // pred_region
      _
    $region9: #{text_only_rgb_forward.1} parent=1 // pred_fallthru
      _
    // Predicated region
    $region10: #{text_only_rgb_forward.1} parent=1 // pred_check
      _
    $region11: #{text_only_rgb_forward.1} parent=1 // pred_check_branch
      %25 = sbr.rel (0) target = $region13
    $region12: #{text_only_rgb_forward.1} parent=1 // pred_region
      _
    $region13: #{text_only_rgb_forward.1} parent=1 // pred_fallthru
      _
    // Predicated region
    $region14: #{text_only_rgb_forward.1} parent=1 // pred_check
      _
    $region15: #{text_only_rgb_forward.1} parent=1 // pred_check_branch
      %27 = sbr.rel (0) target = $region17
    $region16: #{text_only_rgb_forward.1} parent=1 // pred_region
      %s29 = ssub.s32 8192, 8192
      %30 = vsyncadd [#allocation5], %s29
      %s31 = sshll.u32 [#allocation4], 4
      %s32 = int_to_ptr.vmem [resolvable:$true] %s31
      %37 = dma.hbm_to_vmem [thread:$0]  %s4, 8192, %s32, [#allocation5], 128, 128, 8
    $region17: #{text_only_rgb_forward.1} parent=1 // pred_fallthru
      _
    // Predicated region
    $region18: #{text_only_rgb_forward.1} parent=1 // pred_check
      _
    $region19: #{text_only_rgb_forward.1} parent=1 // pred_check_branch
      %39 = sbr.rel (0) target = $region21
    $region20: #{text_only_rgb_forward.1} parent=1 // pred_region
      _
    $region21: #{text_only_rgb_forward.1} parent=1 // pred_fallthru
      _
    // Predicated region
    $region22: #{text_only_rgb_forward.1} parent=1 // pred_check
      _
    $region23: #{text_only_rgb_forward.1} parent=1 // pred_check_branch
      %41 = sbr.rel (0) target = $region25
    $region24: #{text_only_rgb_forward.1} parent=1 // pred_region
      _
    $region25: #{text_only_rgb_forward.1} parent=1 // pred_fallthru
      _
    // Predicated region
    $region26: #{text_only_rgb_forward.1} parent=1 // pred_check
      _
    $region27: #{text_only_rgb_forward.1} parent=1 // pred_check_branch
      %43 = sbr.rel (0) target = $region29
    $region28: #{text_only_rgb_forward.1} parent=1 // pred_region
      _
    $region29: #{text_only_rgb_forward.1} parent=1 // pred_fallthru
      _
    // Predicated region
    $region30: #{text_only_rgb_forward.1} parent=1 // pred_check
      _
    $region31: #{text_only_rgb_forward.1} parent=1 // pred_check_branch
      %45 = sbr.rel (0) target = $region33
    $region32: #{text_only_rgb_forward.1} parent=1 // pred_region
      %46 = dma.done [#allocation5], 8192
    $region33: #{text_only_rgb_forward.1} parent=1 // pred_fallthru
      _
    %v48 = vld [vmem:[%s1] sm:$0xf]
    %v49 = vld [vmem:[%s2] sm:$0xff]
    %v50 = vld [vmem:[%s2 + $0x8] sm:$0xff]
    %v51 = vld [vmem:[%s2 + $0x10] sm:$0xff]
    %v52 = vld [vmem:[%s2 + $0x18] sm:$0xff]
    %v53 = vld [vmem:[%s2 + $0x20] sm:$0xff]
    %v54 = vld [vmem:[%s2 + $0x28] sm:$0xff]
    %v55 = vld [vmem:[%s2 + $0x30] sm:$0xff]
    %v56 = vld [vmem:[%s2 + $0x38] sm:$0xff]
    %v57 = vld [vmem:[%s2 + $0x40] sm:$0xff]
    %v58 = vld [vmem:[%s2 + $0x48] sm:$0xff]
    %v59 = vld [vmem:[%s2 + $0x50] sm:$0xff]
    %v60 = vld [vmem:[%s2 + $0x58] sm:$0xff]
    %v61 = vld [vmem:[%s2 + $0x60] sm:$0xff]
    %v62 = vld [vmem:[%s2 + $0x68] sm:$0xff]
    %v63 = vld [vmem:[%s2 + $0x70] sm:$0xff]
    %v64 = vld [vmem:[%s2 + $0x78] sm:$0xff]
    %v65 = vld [vmem:[%s3] sm:$0xf]
    %v67 = vlaneseq
    %v68 = vshrl.u32 %v67, 7
    %v69 = vsub.s32 0, %v68
    %v70 = vrot.slane %v65, %v69
    %v71 = vlaneseq
    %v72 = vshrl.u32 %v71, 7
    %v73 = vsub.s32 1, %v72
    %v74 = vrot.slane %v65, %v73
    %v75 = vlaneseq
    %v76 = vshrl.u32 %v75, 7
    %v77 = vsub.s32 2, %v76
    %v78 = vrot.slane %v65, %v77
    %v79 = vlaneseq
    %v80 = vshrl.u32 %v79, 7
    %v81 = vsub.s32 3, %v80
    %v82 = vrot.slane %v65, %v81
    %v103 = vunpack.c.l.b16 %v49
    %v104 = vunpack.c.h.b16 %v49
    %v105 = vunpack.c.l.b16 %v50
    %v106 = vunpack.c.h.b16 %v50
    %v107 = vunpack.c.l.b16 %v51
    %v108 = vunpack.c.h.b16 %v51
    %v109 = vunpack.c.l.b16 %v52
    %v110 = vunpack.c.h.b16 %v52
    %v111 = vunpack.c.l.b16 %v53
    %v112 = vunpack.c.h.b16 %v53
    %v113 = vunpack.c.l.b16 %v54
    %v114 = vunpack.c.h.b16 %v54
    %v115 = vunpack.c.l.b16 %v55
    %v116 = vunpack.c.h.b16 %v55
    %v117 = vunpack.c.l.b16 %v56
    %v118 = vunpack.c.h.b16 %v56
    %v119 = vunpack.c.l.b16 %v57
    %v120 = vunpack.c.h.b16 %v57
    %v121 = vunpack.c.l.b16 %v58
    %v122 = vunpack.c.h.b16 %v58
    %v123 = vunpack.c.l.b16 %v59
    %v124 = vunpack.c.h.b16 %v59
    %v125 = vunpack.c.l.b16 %v60
    %v126 = vunpack.c.h.b16 %v60
    %v127 = vunpack.c.l.b16 %v61
    %v128 = vunpack.c.h.b16 %v61
    %v129 = vunpack.c.l.b16 %v62
    %v130 = vunpack.c.h.b16 %v62
    %v131 = vunpack.c.l.b16 %v63
    %v132 = vunpack.c.h.b16 %v63
    %v133 = vunpack.c.l.b16 %v64
    %v134 = vunpack.c.h.b16 %v64
    %v135 = vpack.c.b16 %v107, %v103
    %v136 = vpack.c.b16 %v108, %v104
    %v137 = vpack.c.b16 %v109, %v105
    %v138 = vpack.c.b16 %v110, %v106
    %v139 = vpack.c.b16 %v115, %v111
    %v140 = vpack.c.b16 %v116, %v112
    %v141 = vpack.c.b16 %v117, %v113
    %v142 = vpack.c.b16 %v118, %v114
    %v143 = vpack.c.b16 %v123, %v119
    %v144 = vpack.c.b16 %v124, %v120
    %v145 = vpack.c.b16 %v125, %v121
    %v146 = vpack.c.b16 %v126, %v122
    %v147 = vpack.c.b16 %v131, %v127
    %v148 = vpack.c.b16 %v132, %v128
    %v149 = vpack.c.b16 %v133, %v129
    %v150 = vpack.c.b16 %v134, %v130
    %vm167 = vcmask 523264
    %v169 = vsel %vm167, %v48, 0
    %171 = vmatprep.subr.bf16.mxu0 %v136
    %172 = vmatpush1.bf16.msra.mxu0 %v135
    %173 = vmatprep.subr.bf16.mxu0 %v140
    %174 = vmatpush1.bf16.msra.mxu0 %v139
    %175 = vmatprep.subr.bf16.mxu0 %v144
    %176 = vmatpush1.bf16.msra.mxu0 %v143
    %177 = vmatprep.subr.bf16.mxu0 %v148
    %178 = vmatpush1.bf16.msra.mxu0 %v147
    %179 = vmatprep.subr.bf16.mxu0 0
    %180 = vmatpush1.bf16.msra.mxu0 0
    %181 = vmatprep.subr.bf16.mxu0 0
    %182 = vmatpush1.bf16.msra.mxu0 0
    %183 = vmatprep.subr.bf16.mxu0 0
    %184 = vmatpush1.bf16.msra.mxu0 0
    %185 = vmatprep.subr.bf16.mxu0 0
    %186 = vmatpush1.bf16.msra.mxu0 0
    %187 = vmatprep.subr.bf16.mxu0 0
    %188 = vmatpush1.bf16.msra.mxu0 0
    %189 = vmatprep.subr.bf16.mxu0 0
    %190 = vmatpush1.bf16.msra.mxu0 0
    %191 = vmatprep.subr.bf16.mxu0 0
    %192 = vmatpush1.bf16.msra.mxu0 0
    %193 = vmatprep.subr.bf16.mxu0 0
    %194 = vmatpush1.bf16.msra.mxu0 0
    %195 = vmatprep.subr.bf16.mxu0 0
    %196 = vmatpush1.bf16.msra.mxu0 0
    %197 = vmatprep.subr.bf16.mxu0 0
    %198 = vmatpush1.bf16.msra.mxu0 0
    %199 = vmatprep.subr.bf16.mxu0 0
    %200 = vmatpush1.bf16.msra.mxu0 0
    %201 = vmatprep.subr.bf16.mxu0 0
    %202 = vmatpush1.bf16.msra.mxu0 0
    %203 = vmatprep.mubr.bf16.mxu0 0
    %204 = vmatmul.mubr.bf16.gmra.mrb[0].mxu0 %v169
    %v205 = vpop.f32.mrb[0].mxu0
    %v206 = vadd.f32 %v70, %v205
    %v207 = vpop.f32.mrb[0].mxu0
    %v208 = vadd.f32 %v74, %v207
    %v209 = vpop.f32.mrb[0].mxu0
    %v210 = vpop.f32.mrb[0].mxu0
    %211 = vdwg.mxu0
    %212 = vmatprep.subr.bf16.mxu0 %v138
    %213 = vmatpush1.bf16.msra.mxu0 %v137
    %214 = vmatprep.subr.bf16.mxu0 %v142
    %215 = vmatpush1.bf16.msra.mxu0 %v141
    %216 = vmatprep.subr.bf16.mxu0 %v146
    %217 = vmatpush1.bf16.msra.mxu0 %v145
    %218 = vmatprep.subr.bf16.mxu0 %v150
    %219 = vmatpush1.bf16.msra.mxu0 %v149
    %220 = vmatprep.subr.bf16.mxu0 0
    %221 = vmatpush1.bf16.msra.mxu0 0
    %222 = vmatprep.subr.bf16.mxu0 0
    %223 = vmatpush1.bf16.msra.mxu0 0
    %224 = vmatprep.subr.bf16.mxu0 0
    %225 = vmatpush1.bf16.msra.mxu0 0
    %226 = vmatprep.subr.bf16.mxu0 0
    %227 = vmatpush1.bf16.msra.mxu0 0
    %228 = vmatprep.subr.bf16.mxu0 0
    %229 = vmatpush1.bf16.msra.mxu0 0
    %230 = vmatprep.subr.bf16.mxu0 0
    %231 = vmatpush1.bf16.msra.mxu0 0
    %232 = vmatprep.subr.bf16.mxu0 0
    %233 = vmatpush1.bf16.msra.mxu0 0
    %234 = vmatprep.subr.bf16.mxu0 0
    %235 = vmatpush1.bf16.msra.mxu0 0
    %236 = vmatprep.subr.bf16.mxu0 0
    %237 = vmatpush1.bf16.msra.mxu0 0
    %238 = vmatprep.subr.bf16.mxu0 0
    %239 = vmatpush1.bf16.msra.mxu0 0
    %240 = vmatprep.subr.bf16.mxu0 0
    %241 = vmatpush1.bf16.msra.mxu0 0
    %242 = vmatprep.subr.bf16.mxu0 0
    %243 = vmatpush1.bf16.msra.mxu0 0
    %244 = vmatprep.mubr.bf16.mxu0 0
    %245 = vmatmul.mubr.bf16.gmra.mrb[0].mxu0 %v169
    %v246 = vpop.f32.mrb[0].mxu0
    %v247 = vadd.f32 %v78, %v246
    %v248 = vpop.f32.mrb[0].mxu0
    %v249 = vadd.f32 %v82, %v248
    %v250 = vpop.f32.mrb[0].mxu0
    %v251 = vpop.f32.mrb[0].mxu0
    %252 = vdwg.mxu0
    %v253 = vmax.f32 %v206, 0.0
    %v254 = vmax.f32 %v208, 0.0
    %v255 = vmax.f32 %v247, 0.0
    %v256 = vmax.f32 %v249, 0.0
    %v257 = vpack.c.bf16 %v253, %v253
    %v258 = vpack.c.bf16 %v254, %v254
    %v259 = vpack.c.bf16 %v255, %v255
    %v260 = vpack.c.bf16 %v256, %v256
    %v261 = vld [vmem:[#allocation4] sm:$0xff]
    %v262 = vld [vmem:[#allocation4 + $0x8] sm:$0xff]
    %v263 = vld [vmem:[#allocation4 + $0x10] sm:$0xff]
    %v264 = vld [vmem:[#allocation4 + $0x18] sm:$0xff]
    %v265 = vld [vmem:[#allocation4 + $0x20] sm:$0xff]
    %v266 = vld [vmem:[#allocation4 + $0x28] sm:$0xff]
    %v267 = vld [vmem:[#allocation4 + $0x30] sm:$0xff]
    %v268 = vld [vmem:[#allocation4 + $0x38] sm:$0xff]
    %v269 = vld [vmem:[#allocation4 + $0x40] sm:$0xff]
    %v270 = vld [vmem:[#allocation4 + $0x48] sm:$0xff]
    %v271 = vld [vmem:[#allocation4 + $0x50] sm:$0xff]
    %v272 = vld [vmem:[#allocation4 + $0x58] sm:$0xff]
    %v273 = vld [vmem:[#allocation4 + $0x60] sm:$0xff]
    %v274 = vld [vmem:[#allocation4 + $0x68] sm:$0xff]
    %v275 = vld [vmem:[#allocation4 + $0x70] sm:$0xff]
    %v276 = vld [vmem:[#allocation4 + $0x78] sm:$0xff]
    %v277 = vld [vmem:[#allocation4 + $0x80] sm:$0xff]
    %v278 = vld [vmem:[#allocation4 + $0x88] sm:$0xff]
    %v279 = vld [vmem:[#allocation4 + $0x90] sm:$0xff]
    %v280 = vld [vmem:[#allocation4 + $0x98] sm:$0xff]
    %v281 = vld [vmem:[#allocation4 + $0xa0] sm:$0xff]
    %v282 = vld [vmem:[#allocation4 + $0xa8] sm:$0xff]
    %v283 = vld [vmem:[#allocation4 + $0xb0] sm:$0xff]
    %v284 = vld [vmem:[#allocation4 + $0xb8] sm:$0xff]
    %v285 = vld [vmem:[#allocation4 + $0xc0] sm:$0xff]
    %v286 = vld [vmem:[#allocation4 + $0xc8] sm:$0xff]
    %v287 = vld [vmem:[#allocation4 + $0xd0] sm:$0xff]
    %v288 = vld [vmem:[#allocation4 + $0xd8] sm:$0xff]
    %v289 = vld [vmem:[#allocation4 + $0xe0] sm:$0xff]
    %v290 = vld [vmem:[#allocation4 + $0xe8] sm:$0xff]
    %v291 = vld [vmem:[#allocation4 + $0xf0] sm:$0xff]
    %v292 = vld [vmem:[#allocation4 + $0xf8] sm:$0xff]
    %v293 = vld [vmem:[#allocation4 + $0x100] sm:$0xff]
    %v294 = vld [vmem:[#allocation4 + $0x108] sm:$0xff]
    %v295 = vld [vmem:[#allocation4 + $0x110] sm:$0xff]
    %v296 = vld [vmem:[#allocation4 + $0x118] sm:$0xff]
    %v297 = vld [vmem:[#allocation4 + $0x120] sm:$0xff]
    %v298 = vld [vmem:[#allocation4 + $0x128] sm:$0xff]
    %v299 = vld [vmem:[#allocation4 + $0x130] sm:$0xff]
    %v300 = vld [vmem:[#allocation4 + $0x138] sm:$0xff]
    %v301 = vld [vmem:[#allocation4 + $0x140] sm:$0xff]
    %v302 = vld [vmem:[#allocation4 + $0x148] sm:$0xff]
    %v303 = vld [vmem:[#allocation4 + $0x150] sm:$0xff]
    %v304 = vld [vmem:[#allocation4 + $0x158] sm:$0xff]
    %v305 = vld [vmem:[#allocation4 + $0x160] sm:$0xff]
    %v306 = vld [vmem:[#allocation4 + $0x168] sm:$0xff]
    %v307 = vld [vmem:[#allocation4 + $0x170] sm:$0xff]
    %v308 = vld [vmem:[#allocation4 + $0x178] sm:$0xff]
    %v309 = vld [vmem:[#allocation4 + $0x180] sm:$0xff]
    %v310 = vld [vmem:[#allocation4 + $0x188] sm:$0xff]
    %v311 = vld [vmem:[#allocation4 + $0x190] sm:$0xff]
    %v312 = vld [vmem:[#allocation4 + $0x198] sm:$0xff]
    %v313 = vld [vmem:[#allocation4 + $0x1a0] sm:$0xff]
    %v314 = vld [vmem:[#allocation4 + $0x1a8] sm:$0xff]
    %v315 = vld [vmem:[#allocation4 + $0x1b0] sm:$0xff]
    %v316 = vld [vmem:[#allocation4 + $0x1b8] sm:$0xff]
    %v317 = vld [vmem:[#allocation4 + $0x1c0] sm:$0xff]
    %v318 = vld [vmem:[#allocation4 + $0x1c8] sm:$0xff]
    %v319 = vld [vmem:[#allocation4 + $0x1d0] sm:$0xff]
    %v320 = vld [vmem:[#allocation4 + $0x1d8] sm:$0xff]
    %v321 = vld [vmem:[#allocation4 + $0x1e0] sm:$0xff]
    %v322 = vld [vmem:[#allocation4 + $0x1e8] sm:$0xff]
    %v323 = vld [vmem:[#allocation4 + $0x1f0] sm:$0xff]
    %v324 = vld [vmem:[#allocation4 + $0x1f8] sm:$0xff]
    %v325 = vld [vmem:[%s5] sm:$0x3]
    %v327 = vlaneseq
    %v328 = vshrl.u32 %v327, 7
    %v329 = vsub.s32 0, %v328
    %v330 = vrot.slane %v325, %v329
    %v331 = vlaneseq
    %v332 = vshrl.u32 %v331, 7
    %v333 = vsub.s32 1, %v332
    %v334 = vrot.slane %v325, %v333
    %v401 = vunpack.c.l.b16 %v261
    %v402 = vunpack.c.h.b16 %v261
    %v403 = vunpack.c.l.b16 %v262
    %v404 = vunpack.c.h.b16 %v262
    %v405 = vunpack.c.l.b16 %v263
    %v406 = vunpack.c.h.b16 %v263
    %v407 = vunpack.c.l.b16 %v264
    %v408 = vunpack.c.h.b16 %v264
    %v409 = vunpack.c.l.b16 %v265
    %v410 = vunpack.c.h.b16 %v265
    %v411 = vunpack.c.l.b16 %v266
    %v412 = vunpack.c.h.b16 %v266
    %v413 = vunpack.c.l.b16 %v267
    %v414 = vunpack.c.h.b16 %v267
    %v415 = vunpack.c.l.b16 %v268
    %v416 = vunpack.c.h.b16 %v268
    %v417 = vunpack.c.l.b16 %v269
    %v418 = vunpack.c.h.b16 %v269
    %v419 = vunpack.c.l.b16 %v270
    %v420 = vunpack.c.h.b16 %v270
    %v421 = vunpack.c.l.b16 %v271
    %v422 = vunpack.c.h.b16 %v271
    %v423 = vunpack.c.l.b16 %v272
    %v424 = vunpack.c.h.b16 %v272
    %v425 = vunpack.c.l.b16 %v273
    %v426 = vunpack.c.h.b16 %v273
    %v427 = vunpack.c.l.b16 %v274
    %v428 = vunpack.c.h.b16 %v274
    %v429 = vunpack.c.l.b16 %v275
    %v430 = vunpack.c.h.b16 %v275
    %v431 = vunpack.c.l.b16 %v276
    %v432 = vunpack.c.h.b16 %v276
    %v433 = vunpack.c.l.b16 %v277
    %v434 = vunpack.c.h.b16 %v277
    %v435 = vunpack.c.l.b16 %v278
    %v436 = vunpack.c.h.b16 %v278
    %v437 = vunpack.c.l.b16 %v279
    %v438 = vunpack.c.h.b16 %v279
    %v439 = vunpack.c.l.b16 %v280
    %v440 = vunpack.c.h.b16 %v280
    %v441 = vunpack.c.l.b16 %v281
    %v442 = vunpack.c.h.b16 %v281
    %v443 = vunpack.c.l.b16 %v282
    %v444 = vunpack.c.h.b16 %v282
    %v445 = vunpack.c.l.b16 %v283
    %v446 = vunpack.c.h.b16 %v283
    %v447 = vunpack.c.l.b16 %v284
    %v448 = vunpack.c.h.b16 %v284
    %v449 = vunpack.c.l.b16 %v285
    %v450 = vunpack.c.h.b16 %v285
    %v451 = vunpack.c.l.b16 %v286
    %v452 = vunpack.c.h.b16 %v286
    %v453 = vunpack.c.l.b16 %v287
    %v454 = vunpack.c.h.b16 %v287
    %v455 = vunpack.c.l.b16 %v288
    %v456 = vunpack.c.h.b16 %v288
    %v457 = vunpack.c.l.b16 %v289
    %v458 = vunpack.c.h.b16 %v289
    %v459 = vunpack.c.l.b16 %v290
    %v460 = vunpack.c.h.b16 %v290
    %v461 = vunpack.c.l.b16 %v291
    %v462 = vunpack.c.h.b16 %v291
    %v463 = vunpack.c.l.b16 %v292
    %v464 = vunpack.c.h.b16 %v292
    %v465 = vunpack.c.l.b16 %v293
    %v466 = vunpack.c.h.b16 %v293
    %v467 = vunpack.c.l.b16 %v294
    %v468 = vunpack.c.h.b16 %v294
    %v469 = vunpack.c.l.b16 %v295
    %v470 = vunpack.c.h.b16 %v295
    %v471 = vunpack.c.l.b16 %v296
    %v472 = vunpack.c.h.b16 %v296
    %v473 = vunpack.c.l.b16 %v297
    %v474 = vunpack.c.h.b16 %v297
    %v475 = vunpack.c.l.b16 %v298
    %v476 = vunpack.c.h.b16 %v298
    %v477 = vunpack.c.l.b16 %v299
    %v478 = vunpack.c.h.b16 %v299
    %v479 = vunpack.c.l.b16 %v300
    %v480 = vunpack.c.h.b16 %v300
    %v481 = vunpack.c.l.b16 %v301
    %v482 = vunpack.c.h.b16 %v301
    %v483 = vunpack.c.l.b16 %v302
    %v484 = vunpack.c.h.b16 %v302
    %v485 = vunpack.c.l.b16 %v303
    %v486 = vunpack.c.h.b16 %v303
    %v487 = vunpack.c.l.b16 %v304
    %v488 = vunpack.c.h.b16 %v304
    %v489 = vunpack.c.l.b16 %v305
    %v490 = vunpack.c.h.b16 %v305
    %v491 = vunpack.c.l.b16 %v306
    %v492 = vunpack.c.h.b16 %v306
    %v493 = vunpack.c.l.b16 %v307
    %v494 = vunpack.c.h.b16 %v307
    %v495 = vunpack.c.l.b16 %v308
    %v496 = vunpack.c.h.b16 %v308
    %v497 = vunpack.c.l.b16 %v309
    %v498 = vunpack.c.h.b16 %v309
    %v499 = vunpack.c.l.b16 %v310
    %v500 = vunpack.c.h.b16 %v310
    %v501 = vunpack.c.l.b16 %v311
    %v502 = vunpack.c.h.b16 %v311
    %v503 = vunpack.c.l.b16 %v312
    %v504 = vunpack.c.h.b16 %v312
    %v505 = vunpack.c.l.b16 %v313
    %v506 = vunpack.c.h.b16 %v313
    %v507 = vunpack.c.l.b16 %v314
    %v508 = vunpack.c.h.b16 %v314
    %v509 = vunpack.c.l.b16 %v315
    %v510 = vunpack.c.h.b16 %v315
    %v511 = vunpack.c.l.b16 %v316
    %v512 = vunpack.c.h.b16 %v316
    %v513 = vunpack.c.l.b16 %v317
    %v514 = vunpack.c.h.b16 %v317
    %v515 = vunpack.c.l.b16 %v318
    %v516 = vunpack.c.h.b16 %v318
    %v517 = vunpack.c.l.b16 %v319
    %v518 = vunpack.c.h.b16 %v319
    %v519 = vunpack.c.l.b16 %v320
    %v520 = vunpack.c.h.b16 %v320
    %v521 = vunpack.c.l.b16 %v321
    %v522 = vunpack.c.h.b16 %v321
    %v523 = vunpack.c.l.b16 %v322
    %v524 = vunpack.c.h.b16 %v322
    %v525 = vunpack.c.l.b16 %v323
    %v526 = vunpack.c.h.b16 %v323
    %v527 = vunpack.c.l.b16 %v324
    %v528 = vunpack.c.h.b16 %v324
    %v529 = vpack.c.b16 %v403, %v401
    %v530 = vpack.c.b16 %v404, %v402
    %v531 = vpack.c.b16 %v407, %v405
    %v532 = vpack.c.b16 %v408, %v406
    %v533 = vpack.c.b16 %v411, %v409
    %v534 = vpack.c.b16 %v412, %v410
    %v535 = vpack.c.b16 %v415, %v413
    %v536 = vpack.c.b16 %v416, %v414
    %v537 = vpack.c.b16 %v419, %v417
    %v538 = vpack.c.b16 %v420, %v418
    %v539 = vpack.c.b16 %v423, %v421
    %v540 = vpack.c.b16 %v424, %v422
    %v541 = vpack.c.b16 %v427, %v425
    %v542 = vpack.c.b16 %v428, %v426
    %v543 = vpack.c.b16 %v431, %v429
    %v544 = vpack.c.b16 %v432, %v430
    %v545 = vpack.c.b16 %v435, %v433
    %v546 = vpack.c.b16 %v436, %v434
    %v547 = vpack.c.b16 %v439, %v437
    %v548 = vpack.c.b16 %v440, %v438
    %v549 = vpack.c.b16 %v443, %v441
    %v550 = vpack.c.b16 %v444, %v442
    %v551 = vpack.c.b16 %v447, %v445
    %v552 = vpack.c.b16 %v448, %v446
    %v553 = vpack.c.b16 %v451, %v449
    %v554 = vpack.c.b16 %v452, %v450
    %v555 = vpack.c.b16 %v455, %v453
    %v556 = vpack.c.b16 %v456, %v454
    %v557 = vpack.c.b16 %v459, %v457
    %v558 = vpack.c.b16 %v460, %v458
    %v559 = vpack.c.b16 %v463, %v461
    %v560 = vpack.c.b16 %v464, %v462
    %v561 = vpack.c.b16 %v467, %v465
    %v562 = vpack.c.b16 %v468, %v466
    %v563 = vpack.c.b16 %v471, %v469
    %v564 = vpack.c.b16 %v472, %v470
    %v565 = vpack.c.b16 %v475, %v473
    %v566 = vpack.c.b16 %v476, %v474
    %v567 = vpack.c.b16 %v479, %v477
    %v568 = vpack.c.b16 %v480, %v478
    %v569 = vpack.c.b16 %v483, %v481
    %v570 = vpack.c.b16 %v484, %v482
    %v571 = vpack.c.b16 %v487, %v485
    %v572 = vpack.c.b16 %v488, %v486
    %v573 = vpack.c.b16 %v491, %v489
    %v574 = vpack.c.b16 %v492, %v490
    %v575 = vpack.c.b16 %v495, %v493
    %v576 = vpack.c.b16 %v496, %v494
    %v577 = vpack.c.b16 %v499, %v497
    %v578 = vpack.c.b16 %v500, %v498
    %v579 = vpack.c.b16 %v503, %v501
    %v580 = vpack.c.b16 %v504, %v502
    %v581 = vpack.c.b16 %v507, %v505
    %v582 = vpack.c.b16 %v508, %v506
    %v583 = vpack.c.b16 %v511, %v509
    %v584 = vpack.c.b16 %v512, %v510
    %v585 = vpack.c.b16 %v515, %v513
    %v586 = vpack.c.b16 %v516, %v514
    %v587 = vpack.c.b16 %v519, %v517
    %v588 = vpack.c.b16 %v520, %v518
    %v589 = vpack.c.b16 %v523, %v521
    %v590 = vpack.c.b16 %v524, %v522
    %v591 = vpack.c.b16 %v527, %v525
    %v592 = vpack.c.b16 %v528, %v526
    %657 = vmatprep.subr.bf16.mxu0 %v530
    %658 = vmatpush1.bf16.msra.mxu0 %v529
    %659 = vmatprep.subr.bf16.mxu0 %v532
    %660 = vmatpush1.bf16.msra.mxu0 %v531
    %661 = vmatprep.subr.bf16.mxu0 %v534
    %662 = vmatpush1.bf16.msra.mxu0 %v533
    %663 = vmatprep.subr.bf16.mxu0 %v536
    %664 = vmatpush1.bf16.msra.mxu0 %v535
    %665 = vmatprep.subr.bf16.mxu0 %v538
    %666 = vmatpush1.bf16.msra.mxu0 %v537
    %667 = vmatprep.subr.bf16.mxu0 %v540
    %668 = vmatpush1.bf16.msra.mxu0 %v539
    %669 = vmatprep.subr.bf16.mxu0 %v542
    %670 = vmatpush1.bf16.msra.mxu0 %v541
    %671 = vmatprep.subr.bf16.mxu0 %v544
    %672 = vmatpush1.bf16.msra.mxu0 %v543
    %673 = vmatprep.subr.bf16.mxu0 %v546
    %674 = vmatpush1.bf16.msra.mxu0 %v545
    %675 = vmatprep.subr.bf16.mxu0 %v548
    %676 = vmatpush1.bf16.msra.mxu0 %v547
    %677 = vmatprep.subr.bf16.mxu0 %v550
    %678 = vmatpush1.bf16.msra.mxu0 %v549
    %679 = vmatprep.subr.bf16.mxu0 %v552
    %680 = vmatpush1.bf16.msra.mxu0 %v551
    %681 = vmatprep.subr.bf16.mxu0 %v554
    %682 = vmatpush1.bf16.msra.mxu0 %v553
    %683 = vmatprep.subr.bf16.mxu0 %v556
    %684 = vmatpush1.bf16.msra.mxu0 %v555
    %685 = vmatprep.subr.bf16.mxu0 %v558
    %686 = vmatpush1.bf16.msra.mxu0 %v557
    %687 = vmatprep.subr.bf16.mxu0 %v560
    %688 = vmatpush1.bf16.msra.mxu0 %v559
    %689 = vmatprep.mubr.bf16.mxu0 %v258
    %690 = vmatmul.mubr.bf16.gmra.mrb[0].mxu0 %v257
    %v691 = vpop.f32.mrb[0].mxu0
    %v692 = vadd.f32 %v330, %v691
    %v693 = vpop.f32.mrb[0].mxu0
    %v694 = vadd.f32 %v334, %v693
    %v695 = vpop.f32.mrb[0].mxu0
    %v696 = vpop.f32.mrb[0].mxu0
    %697 = vdwg.mxu0
    %698 = vmatprep.subr.bf16.mxu0 %v562
    %699 = vmatpush1.bf16.msra.mxu0 %v561
    %700 = vmatprep.subr.bf16.mxu0 %v564
    %701 = vmatpush1.bf16.msra.mxu0 %v563
    %702 = vmatprep.subr.bf16.mxu0 %v566
    %703 = vmatpush1.bf16.msra.mxu0 %v565
    %704 = vmatprep.subr.bf16.mxu0 %v568
    %705 = vmatpush1.bf16.msra.mxu0 %v567
    %706 = vmatprep.subr.bf16.mxu0 %v570
    %707 = vmatpush1.bf16.msra.mxu0 %v569
    %708 = vmatprep.subr.bf16.mxu0 %v572
    %709 = vmatpush1.bf16.msra.mxu0 %v571
    %710 = vmatprep.subr.bf16.mxu0 %v574
    %711 = vmatpush1.bf16.msra.mxu0 %v573
    %712 = vmatprep.subr.bf16.mxu0 %v576
    %713 = vmatpush1.bf16.msra.mxu0 %v575
    %714 = vmatprep.subr.bf16.mxu0 %v578
    %715 = vmatpush1.bf16.msra.mxu0 %v577
    %716 = vmatprep.subr.bf16.mxu0 %v580
    %717 = vmatpush1.bf16.msra.mxu0 %v579
    %718 = vmatprep.subr.bf16.mxu0 %v582
    %719 = vmatpush1.bf16.msra.mxu0 %v581
    %720 = vmatprep.subr.bf16.mxu0 %v584
    %721 = vmatpush1.bf16.msra.mxu0 %v583
    %722 = vmatprep.subr.bf16.mxu0 %v586
    %723 = vmatpush1.bf16.msra.mxu0 %v585
    %724 = vmatprep.subr.bf16.mxu0 %v588
    %725 = vmatpush1.bf16.msra.mxu0 %v587
    %726 = vmatprep.subr.bf16.mxu0 %v590
    %727 = vmatpush1.bf16.msra.mxu0 %v589
    %728 = vmatprep.subr.bf16.mxu0 %v592
    %729 = vmatpush1.bf16.msra.mxu0 %v591
    %730 = vmatprep.mubr.bf16.mxu0 %v260
    %731 = vmatmul.mubr.bf16.gmra.mrb[0].mxu0 %v259
    %v732 = vpop.f32.mrb[0].mxu0
    %v733 = vadd.f32 %v692, %v732
    %v734 = vpop.f32.mrb[0].mxu0
    %v735 = vadd.f32 %v694, %v734
    %v736 = vpop.f32.mrb[0].mxu0
    %v737 = vpop.f32.mrb[0].mxu0
    %738 = vdwg.mxu0
    %v739 = vmax.f32 %v733, 0.0
    %v740 = vmax.f32 %v735, 0.0
    %v741 = vpack.c.bf16 %v739, %v739
    %v742 = vpack.c.bf16 %v740, %v740
    %v743 = vld [vmem:[%s6] sm:$0xf]
    %v744 = vld [vmem:[%s6 + $0x4] sm:$0xf]
    %v745 = vld [vmem:[%s6 + $0x8] sm:$0xf]
    %v746 = vld [vmem:[%s6 + $0xc] sm:$0xf]
    %v747 = vld [vmem:[%s6 + $0x10] sm:$0xf]
    %v748 = vld [vmem:[%s6 + $0x14] sm:$0xf]
    %v749 = vld [vmem:[%s6 + $0x18] sm:$0xf]
    %v750 = vld [vmem:[%s6 + $0x1c] sm:$0xf]
    %v751 = vld [vmem:[%s6 + $0x20] sm:$0xf]
    %v752 = vld [vmem:[%s6 + $0x24] sm:$0xf]
    %v753 = vld [vmem:[%s6 + $0x28] sm:$0xf]
    %v754 = vld [vmem:[%s6 + $0x2c] sm:$0xf]
    %v755 = vld [vmem:[%s6 + $0x30] sm:$0xf]
    %v756 = vld [vmem:[%s6 + $0x34] sm:$0xf]
    %v757 = vld [vmem:[%s6 + $0x38] sm:$0xf]
    %v758 = vld [vmem:[%s6 + $0x3c] sm:$0xf]
    %v759 = vld [vmem:[%s6 + $0x40] sm:$0xf]
    %v760 = vld [vmem:[%s6 + $0x44] sm:$0xf]
    %v761 = vld [vmem:[%s6 + $0x48] sm:$0xf]
    %v762 = vld [vmem:[%s6 + $0x4c] sm:$0xf]
    %v763 = vld [vmem:[%s6 + $0x50] sm:$0xf]
    %v764 = vld [vmem:[%s6 + $0x54] sm:$0xf]
    %v765 = vld [vmem:[%s6 + $0x58] sm:$0xf]
    %v766 = vld [vmem:[%s6 + $0x5c] sm:$0xf]
    %v767 = vld [vmem:[%s6 + $0x60] sm:$0xf]
    %v768 = vld [vmem:[%s6 + $0x64] sm:$0xf]
    %v769 = vld [vmem:[%s6 + $0x68] sm:$0xf]
    %v770 = vld [vmem:[%s6 + $0x6c] sm:$0xf]
    %v771 = vld [vmem:[%s6 + $0x70] sm:$0xf]
    %v772 = vld [vmem:[%s6 + $0x74] sm:$0xf]
    %v773 = vld [vmem:[%s6 + $0x78] sm:$0xf]
    %v774 = vld [vmem:[%s6 + $0x7c] sm:$0xf]
    %v775 = vld [vmem:[%s7] sm:$0x1]
    %v777 = vlaneseq
    %v778 = vshrl.u32 %v777, 7
    %v779 = vsub.s32 0, %v778
    %v780 = vrot.slane %v775, %v779
    %v814 = vunpack.c.l.b16 %v743
    %v815 = vunpack.c.l.b16 %v744
    %v816 = vunpack.c.l.b16 %v745
    %v817 = vunpack.c.l.b16 %v746
    %v818 = vunpack.c.l.b16 %v747
    %v819 = vunpack.c.l.b16 %v748
    %v820 = vunpack.c.l.b16 %v749
    %v821 = vunpack.c.l.b16 %v750
    %v822 = vunpack.c.l.b16 %v751
    %v823 = vunpack.c.l.b16 %v752
    %v824 = vunpack.c.l.b16 %v753
    %v825 = vunpack.c.l.b16 %v754
    %v826 = vunpack.c.l.b16 %v755
    %v827 = vunpack.c.l.b16 %v756
    %v828 = vunpack.c.l.b16 %v757
    %v829 = vunpack.c.l.b16 %v758
    %v830 = vunpack.c.l.b16 %v759
    %v831 = vunpack.c.l.b16 %v760
    %v832 = vunpack.c.l.b16 %v761
    %v833 = vunpack.c.l.b16 %v762
    %v834 = vunpack.c.l.b16 %v763
    %v835 = vunpack.c.l.b16 %v764
    %v836 = vunpack.c.l.b16 %v765
    %v837 = vunpack.c.l.b16 %v766
    %v838 = vunpack.c.l.b16 %v767
    %v839 = vunpack.c.l.b16 %v768
    %v840 = vunpack.c.l.b16 %v769
    %v841 = vunpack.c.l.b16 %v770
    %v842 = vunpack.c.l.b16 %v771
    %v843 = vunpack.c.l.b16 %v772
    %v844 = vunpack.c.l.b16 %v773
    %v845 = vunpack.c.l.b16 %v774
    %v846 = vpack.c.b16 %v815, %v814
    %v847 = vpack.c.b16 %v817, %v816
    %v848 = vpack.c.b16 %v819, %v818
    %v849 = vpack.c.b16 %v821, %v820
    %v850 = vpack.c.b16 %v823, %v822
    %v851 = vpack.c.b16 %v825, %v824
    %v852 = vpack.c.b16 %v827, %v826
    %v853 = vpack.c.b16 %v829, %v828
    %v854 = vpack.c.b16 %v831, %v830
    %v855 = vpack.c.b16 %v833, %v832
    %v856 = vpack.c.b16 %v835, %v834
    %v857 = vpack.c.b16 %v837, %v836
    %v858 = vpack.c.b16 %v839, %v838
    %v859 = vpack.c.b16 %v841, %v840
    %v860 = vpack.c.b16 %v843, %v842
    %v861 = vpack.c.b16 %v845, %v844
    %878 = vmatprep.subr.bf16.mxu0 0
    %879 = vmatpush1.bf16.msra.mxu0 %v846
    %880 = vmatprep.subr.bf16.mxu0 0
    %881 = vmatpush1.bf16.msra.mxu0 %v847
    %882 = vmatprep.subr.bf16.mxu0 0
    %883 = vmatpush1.bf16.msra.mxu0 %v848
    %884 = vmatprep.subr.bf16.mxu0 0
    %885 = vmatpush1.bf16.msra.mxu0 %v849
    %886 = vmatprep.subr.bf16.mxu0 0
    %887 = vmatpush1.bf16.msra.mxu0 %v850
    %888 = vmatprep.subr.bf16.mxu0 0
    %889 = vmatpush1.bf16.msra.mxu0 %v851
    %890 = vmatprep.subr.bf16.mxu0 0
    %891 = vmatpush1.bf16.msra.mxu0 %v852
    %892 = vmatprep.subr.bf16.mxu0 0
    %893 = vmatpush1.bf16.msra.mxu0 %v853
    %894 = vmatprep.subr.bf16.mxu0 0
    %895 = vmatpush1.bf16.msra.mxu0 %v854
    %896 = vmatprep.subr.bf16.mxu0 0
    %897 = vmatpush1.bf16.msra.mxu0 %v855
    %898 = vmatprep.subr.bf16.mxu0 0
    %899 = vmatpush1.bf16.msra.mxu0 %v856
    %900 = vmatprep.subr.bf16.mxu0 0
    %901 = vmatpush1.bf16.msra.mxu0 %v857
    %902 = vmatprep.subr.bf16.mxu0 0
    %903 = vmatpush1.bf16.msra.mxu0 %v858
    %904 = vmatprep.subr.bf16.mxu0 0
    %905 = vmatpush1.bf16.msra.mxu0 %v859
    %906 = vmatprep.subr.bf16.mxu0 0
    %907 = vmatpush1.bf16.msra.mxu0 %v860
    %908 = vmatprep.subr.bf16.mxu0 0
    %909 = vmatpush1.bf16.msra.mxu0 %v861
    %910 = vmatprep.mubr.bf16.mxu0 %v742
    %911 = vmatmul.mubr.bf16.gmra.mrb[0].mxu0 %v741
    %v912 = vpop.f32.mrb[0].mxu0
    %v913 = vadd.f32 %v780, %v912
    %v914 = vpop.f32.mrb[0].mxu0
    %v915 = vpop.f32.mrb[0].mxu0
    %v916 = vpop.f32.mrb[0].mxu0
    %917 = vdwg.mxu0
    %v918 = vsub.f32 0.0, %v913
    %v919 = vmul.f32 %v918, 1.442695
    %v920 = vpow.pop %v919
    %v921 = vadd.f32 %v920, 1.0
    %v922 = vrcp.pop %v921
    %s923 = sld [smem:[#allocation3]]
    %s924 = sld [smem:[#allocation3 + $0x1]]
    %v925 = vstv %s923
    %v926 = vmul.f32 %v922, %v925
    %v927 = vstv %s924
    %v928 = vmul.f32 %v922, %v927
    %930 = vrot.lane.b32.xlu0 %v928, 125
    %v931 = vpop.permute.xlu0 %930
    %v933 = vadd.f32 %v926, %v931
    %vm934 = vcmask 23552
    %935 = vst.msk [vmem:[%s8] sm:$0xff] %vm934, %v933
    // Predicated region
    $region34: #{text_only_rgb_forward.1} parent=1 // pred_check
      _
    $region35: #{text_only_rgb_forward.1} parent=1 // pred_check_branch
      %937 = sbr.rel (0) target = $region37
    $region36: #{text_only_rgb_forward.1} parent=1 // pred_region
      _
    $region37: #{text_only_rgb_forward.1} parent=1 // pred_fallthru
      _
    // Predicated region
    $region38: #{text_only_rgb_forward.1} parent=1 // pred_check
      _
    $region39: #{text_only_rgb_forward.1} parent=1 // pred_check_branch
      %939 = sbr.rel (0) target = $region41
    $region40: #{text_only_rgb_forward.1} parent=1 // pred_region
      _
    $region41: #{text_only_rgb_forward.1} parent=1 // pred_fallthru
      _
    %940 = vsyncpa [#allocation5], 1

</llo_original>
